<compile_context>
chip_gen: v7x
topology: tpu7x:2x2x1
jax: 0.10.0
libtpu: 0.0.40
codegen_flags: <defaults>
</compile_context>

<pallas_src>
import jax
import jax.numpy as jnp
from jax.experimental import pallas as pl
from jax.experimental.pallas import tpu as pltpu

EPS = 1e-5  # PyTorch BatchNorm2d default eps


def _round_up(x, m):
    return (x + m - 1) // m * m


def _chip_budget():
    """(vmem_limit_bytes, fallback-GEMM tile rows) tuned per TPU generation."""
    try:
        cap = int(pltpu.get_tpu_info().vmem_capacity_bytes)
    except Exception:                      # query unavailable -> conservative
        cap = 64 * 1024 * 1024
    if cap >= 100 * 1024 * 1024:           # v5e / v6e: 128 MiB physical VMEM
        return 96 * 1024 * 1024, 1024
    return 48 * 1024 * 1024, 512           # v7x: 64 MiB per TensorCore


def _halo_fits(hp, wp, cin_k, c_pad, vmem_limit):
    """Rough per-image VMEM footprint check for the halo conv kernels."""
    ho, wo = hp - 2, wp - 2
    lane_c = max(cin_k, 128)
    need = (2 * hp * wp * lane_c * 2        # double-buffered bf16 halo input
            + 9 * lane_c * c_pad * 2        # resident taps
            + 2 * ho * wo * c_pad * 2       # double-buffered bf16 output
            + 2 * hp * wp * lane_c * 4      # f32 prologue temporaries
            + 2 * ho * wo * c_pad * 4)      # f32 accumulator
    return need < vmem_limit * 3 // 4


# ---------------------------------------------------------------------------
# Pallas kernels
# ---------------------------------------------------------------------------
def _make_conv3x3_kernel(ho, wo, fuse_bn):
    """3x3 / stride-1 conv over one spatially pre-padded image.

    If fuse_bn, a BN+ReLU prologue (scale/shift of the *previous* conv's BN)
    is applied to the halo'd input tile, with the 1-px border masked back to
    exactly zero (it is conv padding).  Emits the raw conv output (bf16, flat
    (Ho*Wo, Cp) rows) plus f32 per-image sum / sum-of-squares for this conv's
    own training-mode BN statistics.
    """
    hp, wp = ho + 2, wo + 2

    def kernel(*refs):
        if fuse_bn:
            x_ref, w_ref, scale_ref, shift_ref, y_ref, s_ref, q_ref = refs
        else:
            x_ref, w_ref, y_ref, s_ref, q_ref = refs

        x = x_ref[0]                                       # (hp, wp, C) bf16
        if fuse_bn:
            a = x.astype(jnp.float32) * scale_ref[...] + shift_ref[...]
            hh = jax.lax.broadcasted_iota(jnp.int32, (hp, wp), 0)
            ww = jax.lax.broadcasted_iota(jnp.int32, (hp, wp), 1)
            interior = ((hh >= 1) & (hh <= ho) & (ww >= 1) & (ww <= wo))[:, :, None]
            x = jnp.where(interior, jnp.maximum(a, 0.0), 0.0).astype(jnp.bfloat16)

        # 9-tap in-VMEM gather + accumulated MXU GEMMs (no HBM im2col).
        acc = None
        for ki in range(3):
            for kj in range(3):
                tap = x[ki:ki + ho, kj:kj + wo, :].reshape(ho * wo, x.shape[-1])
                contrib = jnp.dot(tap, w_ref[ki * 3 + kj],
                                  preferred_element_type=jnp.float32)
                acc = contrib if acc is None else acc + contrib

        y_ref[...] = acc.astype(y_ref.dtype)               # bf16 raw conv out
        s = jnp.sum(acc, axis=0, keepdims=True)            # stats from f32 acc
        q = jnp.sum(acc * acc, axis=0, keepdims=True)
        s_ref[...] = s.reshape(1, 1, s.shape[-1])
        q_ref[...] = q.reshape(1, 1, q.shape[-1])

    return kernel


def _gemm_stats_kernel(p_ref, w_ref, y_ref, s_ref, q_ref):
    """Fallback (im2col) GEMM tile + per-tile partial BN statistics."""
    y = jnp.dot(p_ref[...], w_ref[...], preferred_element_type=jnp.float32)
    y_ref[...] = y.astype(y_ref.dtype)                     # bf16 raw conv out
    s = jnp.sum(y, axis=0, keepdims=True)
    q = jnp.sum(y * y, axis=0, keepdims=True)
    s_ref[...] = s.reshape(1, 1, s.shape[-1])
    q_ref[...] = q.reshape(1, 1, q.shape[-1])


def _bn_add_relu_kernel(y_ref, scale_ref, shift_ref, skip_ref, o_ref):
    """o = relu(y*scale + shift + skip)   (BN2 finalize, identity shortcut)."""
    acc = (y_ref[...].astype(jnp.float32) * scale_ref[...] + shift_ref[...]
           + skip_ref[...].astype(jnp.float32))
    o_ref[...] = jnp.maximum(acc, 0.0).astype(o_ref.dtype)


def _bn_conv1x1_add_relu_kernel(y_ref, scale_ref, shift_ref, xs_ref, w3_ref,
                                b3_ref, o_ref):
    """o = relu(y*scale + shift + (Xs @ W3 + b3))  (BN2 finalize, 1x1 shortcut)."""
    skip = jnp.dot(xs_ref[...], w3_ref[...], preferred_element_type=jnp.float32)
    acc = (y_ref[...].astype(jnp.float32) * scale_ref[...] + shift_ref[...]
           + skip + b3_ref[...])
    o_ref[...] = jnp.maximum(acc, 0.0).astype(o_ref.dtype)


# ---------------------------------------------------------------------------
# pallas_call wrappers
# ---------------------------------------------------------------------------
def _conv3x3_stats(x_pad, w_taps, scale=None, shift=None, *, vmem_limit):
    """Per-image halo conv (stride 1).  Returns (y_flat bf16, sum f32, sq f32)."""
    n, hp, wp, cin_k = x_pad.shape
    ho, wo = hp - 2, wp - 2
    rows = ho * wo
    c_pad = w_taps.shape[-1]
    fuse = scale is not None

    in_specs = [
        pl.BlockSpec((1, hp, wp, cin_k), lambda i: (i, 0, 0, 0)),  # halo image
        pl.BlockSpec((9, cin_k, c_pad), lambda i: (0, 0, 0)),      # taps resident
    ]
    args = [x_pad, w_taps]
    if fuse:
        in_specs += [pl.BlockSpec((1, c_pad), lambda i: (0, 0)),
                     pl.BlockSpec((1, c_pad), lambda i: (0, 0))]
        args += [scale, shift]

    flops = 2 * n * rows * 9 * cin_k * c_pad
    bytes_accessed = (x_pad.size * 2 + w_taps.size * 2
                      + n * rows * c_pad * 2 + 2 * n * c_pad * 4)
    return pl.pallas_call(
        _make_conv3x3_kernel(ho, wo, fuse),
        grid=(n,),
        in_specs=in_specs,
        out_specs=(
            pl.BlockSpec((rows, c_pad), lambda i: (i, 0)),         # raw conv out
            pl.BlockSpec((1, 1, c_pad), lambda i: (i, 0, 0)),      # partial sum
            pl.BlockSpec((1, 1, c_pad), lambda i: (i, 0, 0)),      # partial sumsq
        ),
        out_shape=(
            jax.ShapeDtypeStruct((n * rows, c_pad), jnp.bfloat16),
            jax.ShapeDtypeStruct((n, 1, c_pad), jnp.float32),
            jax.ShapeDtypeStruct((n, 1, c_pad), jnp.float32),
        ),
        compiler_params=pltpu.CompilerParams(
            dimension_semantics=("parallel",),
            vmem_limit_bytes=vmem_limit),
        cost_estimate=pl.CostEstimate(flops=flops, transcendentals=0,
                                      bytes_accessed=bytes_accessed),
    )(*args)


def _conv_gemm_stats(patches, w_mat, tm, vmem_limit):
    """Fallback tiled GEMM over M (im2col patches) + per-tile partial stats."""
    m_pad, k_pad = patches.shape
    _, c_pad = w_mat.shape
    n_tiles = m_pad // tm
    flops = 2 * m_pad * k_pad * c_pad
    bytes_accessed = (patches.size * 2 + w_mat.size * 2
                      + m_pad * c_pad * 2 + 2 * n_tiles * c_pad * 4)
    return pl.pallas_call(
        _gemm_stats_kernel,
        grid=(n_tiles,),
        in_specs=[
            pl.BlockSpec((tm, k_pad), lambda i: (i, 0)),
            pl.BlockSpec((k_pad, c_pad), lambda i: (0, 0)),        # W resident
        ],
        out_specs=(
            pl.BlockSpec((tm, c_pad), lambda i: (i, 0)),
            pl.BlockSpec((1, 1, c_pad), lambda i: (i, 0, 0)),
            pl.BlockSpec((1, 1, c_pad), lambda i: (i, 0, 0)),
        ),
        out_shape=(
            jax.ShapeDtypeStruct((m_pad, c_pad), jnp.bfloat16),
            jax.ShapeDtypeStruct((n_tiles, 1, c_pad), jnp.float32),
            jax.ShapeDtypeStruct((n_tiles, 1, c_pad), jnp.float32),
        ),
        compiler_params=pltpu.CompilerParams(
            dimension_semantics=("parallel",),
            vmem_limit_bytes=vmem_limit),
        cost_estimate=pl.CostEstimate(flops=flops, transcendentals=0,
                                      bytes_accessed=bytes_accessed),
    )(patches, w_mat)


def _bn_add_relu(y, scale, shift, skip, rows, n, vmem_limit):
    m, c_pad = y.shape
    return pl.pallas_call(
        _bn_add_relu_kernel,
        grid=(n,),
        in_specs=[
            pl.BlockSpec((rows, c_pad), lambda i: (i, 0)),
            pl.BlockSpec((1, c_pad), lambda i: (0, 0)),
            pl.BlockSpec((1, c_pad), lambda i: (0, 0)),
            pl.BlockSpec((rows, c_pad), lambda i: (i, 0)),
        ],
        out_specs=pl.BlockSpec((rows, c_pad), lambda i: (i, 0)),
        out_shape=jax.ShapeDtypeStruct((m, c_pad), jnp.float32),
        compiler_params=pltpu.CompilerParams(
            dimension_semantics=("parallel",), vmem_limit_bytes=vmem_limit),
    )(y, scale, shift, skip)


def _bn_conv1x1_add_relu(y, scale, shift, xs, w3, b3, rows, n, vmem_limit):
    m, c_pad = y.shape
    _, cin = xs.shape
    return pl.pallas_call(
        _bn_conv1x1_add_relu_kernel,
        grid=(n,),
        in_specs=[
            pl.BlockSpec((rows, c_pad), lambda i: (i, 0)),
            pl.BlockSpec((1, c_pad), lambda i: (0, 0)),
            pl.BlockSpec((1, c_pad), lambda i: (0, 0)),
            pl.BlockSpec((rows, cin), lambda i: (i, 0)),
            pl.BlockSpec((cin, c_pad), lambda i: (0, 0)),          # W3 resident
            pl.BlockSpec((1, c_pad), lambda i: (0, 0)),
        ],
        out_specs=pl.BlockSpec((rows, c_pad), lambda i: (i, 0)),
        out_shape=jax.ShapeDtypeStruct((m, c_pad), jnp.float32),
        compiler_params=pltpu.CompilerParams(
            dimension_semantics=("parallel",), vmem_limit_bytes=vmem_limit),
        cost_estimate=pl.CostEstimate(
            flops=2 * m * cin * c_pad, transcendentals=0,
            bytes_accessed=y.size * 2 + xs.size * 2 + w3.size * 2
                           + m * c_pad * 4),
    )(y, scale, shift, xs, w3, b3)


# ---------------------------------------------------------------------------
# JAX glue: padding, weight reshaping, im2col fallback, BN folding, params
# ---------------------------------------------------------------------------
def _im2col(x_nhwc, kh, kw, stride, pad):
    """x: (N,H,W,C) -> patches (N*Ho*Wo, kh*kw*C), ordered (ki, kj, c)."""
    n, h, w, c = x_nhwc.shape
    xp = jnp.pad(x_nhwc, ((0, 0), (pad, pad), (pad, pad), (0, 0)))
    ho = (h + 2 * pad - kh) // stride + 1
    wo = (w + 2 * pad - kw) // stride + 1
    cols = []
    for i in range(kh):
        for j in range(kw):
            cols.append(xp[:, i:i + stride * ho:stride, j:j + stride * wo:stride, :])
    patches = jnp.concatenate(cols, axis=-1).reshape(n * ho * wo, kh * kw * c)
    return patches, ho, wo


def _oihw_to_mat(w_oihw):
    """PyTorch (Cout,Cin,kh,kw) -> (kh*kw*Cin, Cout), matching _im2col order."""
    cout, cin, kh, kw = w_oihw.shape
    return jnp.transpose(w_oihw, (2, 3, 1, 0)).reshape(kh * kw * cin, cout)


def _oihw_to_taps(w_oihw, c_pad, cin_pad=None):
    """PyTorch (Cout,Cin,3,3) -> (9, Cin[_pad], c_pad) bf16 tap matrices."""
    cout, cin, kh, kw = w_oihw.shape
    t = jnp.transpose(w_oihw, (2, 3, 1, 0)).reshape(kh * kw, cin, cout)
    cin_pad = cin if cin_pad is None else cin_pad
    t = jnp.pad(t, ((0, 0), (0, cin_pad - cin), (0, c_pad - cout)))
    return t.astype(jnp.bfloat16)


def _pad2d(a, rows, cols):
    return jnp.pad(a, ((0, rows - a.shape[0]), (0, cols - a.shape[1])))


def _bn_coeffs(sum_vec, sq_vec, m, gamma, beta, c_pad):
    """Fold training-mode BN into per-channel (scale, shift), f32."""
    mean = sum_vec / m
    # TODO(synk): E[x^2]-E[x]^2 in f32 can cancel for large-mean activations;
    # switch to a shifted / Welford-style combine for trained weights.
    var = jnp.maximum(sq_vec / m - mean * mean, 0.0)
    g = jnp.pad(gamma.astype(jnp.float32), (0, c_pad - gamma.shape[0]))
    b = jnp.pad(beta.astype(jnp.float32), (0, c_pad - beta.shape[0]))
    scale = g * jax.lax.rsqrt(var + EPS)
    shift = b - mean * scale
    return scale[None, :], shift[None, :]


def init_residual_params(key, input_channels, num_channels, use_1x1conv):
    ks = jax.random.split(key, 6)
    p = {
        "w1": jax.random.normal(ks[0], (num_channels, input_channels, 3, 3), jnp.float32) * 0.1,
        "b1": jax.random.normal(ks[1], (num_channels,), jnp.float32) * 0.05,
        "w2": jax.random.normal(ks[2], (num_channels, num_channels, 3, 3), jnp.float32) * 0.1,
        "b2": jax.random.normal(ks[3], (num_channels,), jnp.float32) * 0.05,
        # BatchNorm affine params (PyTorch init: weight=1, bias=0)
        "g1": jnp.ones((num_channels,), jnp.float32),
        "be1": jnp.zeros((num_channels,), jnp.float32),
        "g2": jnp.ones((num_channels,), jnp.float32),
        "be2": jnp.zeros((num_channels,), jnp.float32),
    }
    if use_1x1conv:
        p["w3"] = jax.random.normal(ks[4], (num_channels, input_channels, 1, 1), jnp.float32) * 0.1
        p["b3"] = jax.random.normal(ks[5], (num_channels,), jnp.float32) * 0.05
    return p


# ---------------------------------------------------------------------------
# Forward pass (Pallas)
# ---------------------------------------------------------------------------
def residual_forward(params, x_nchw, *, strides=1, use_1x1conv=False):
    # TODO(synk): an NHWC-native entry point would drop these two transposes.
    x = jnp.transpose(x_nchw, (0, 2, 3, 1)).astype(jnp.float32)   # NCHW -> NHWC
    n, h, w, cin = x.shape
    cout = params["w1"].shape[0]
    c_pad = _round_up(cout, 128)              # lane-dense output channels
    ho = (h + 2 - 3) // strides + 1
    wo = (w + 2 - 3) // strides + 1
    m = n * ho * wo
    x_bf = x.astype(jnp.bfloat16)             # bf16 matmul operands
    vmem_limit, tm_gemm = _chip_budget()

    # ---- conv1 + BN1 batch statistics --------------------------------------
    use_halo1 = (strides == 1 and (ho * wo) % 8 == 0
                 and _halo_fits(h + 2, w + 2, cin, c_pad, vmem_limit))
    if use_halo1:
        xp = jnp.pad(x_bf, ((0, 0), (1, 1), (1, 1), (0, 0)))
        w1t = _oihw_to_taps(params["w1"], c_pad)            # (9, cin, c_pad)
        y1_raw, s1p, q1p = _conv3x3_stats(xp, w1t, vmem_limit=vmem_limit)
    else:
        # Stride-2 downsampling conv: im2col fallback (9/s^2 blow-up only).
        # TODO(synk): an in-kernel strided halo gather would remove this too.
        p1, _, _ = _im2col(x_bf, 3, 3, strides, 1)
        tm = min(_round_up(m, 8), tm_gemm)
        m_pad = _round_up(m, tm)
        k1_pad = _round_up(p1.shape[1], 128)
        p1 = _pad2d(p1, m_pad, k1_pad)
        w1m = _pad2d(_oihw_to_mat(params["w1"]).astype(jnp.bfloat16), k1_pad, c_pad)
        y1_full, s1p, q1p = _conv_gemm_stats(p1, w1m, tm, vmem_limit)
        y1_raw = y1_full[:m]
    s1 = jnp.sum(s1p, axis=(0, 1))
    q1 = jnp.sum(q1p, axis=(0, 1))
    scale1, shift1 = _bn_coeffs(s1, q1, m, params["g1"], params["be1"], c_pad)

    # ---- conv2 (fused BN1+ReLU prologue) + BN2 batch statistics -------------
    assert (ho * wo) % 8 == 0 and _halo_fits(ho + 2, wo + 2, c_pad, c_pad, vmem_limit), (
        "TODO(synk): band-tiled halo path for shapes exceeding the per-image "
        "VMEM budget")
    y1p = jnp.pad(y1_raw.reshape(n, ho, wo, c_pad), ((0, 0), (1, 1), (1, 1), (0, 0)))
    w2t = _oihw_to_taps(params["w2"], c_pad, cin_pad=c_pad)  # (9, c_pad, c_pad)
    y2_raw, s2p, q2p = _conv3x3_stats(y1p, w2t, scale1, shift1,
                                      vmem_limit=vmem_limit)
    s2 = jnp.sum(s2p, axis=(0, 1))
    q2 = jnp.sum(q2p, axis=(0, 1))
    scale2, shift2 = _bn_coeffs(s2, q2, m, params["g2"], params["be2"], c_pad)

    # ---- BN2 + shortcut + ReLU (finalize, one image per grid step) ----------
    rows = ho * wo
    if use_1x1conv:
        xs = x_bf[:, ::strides, ::strides, :].reshape(m, cin)
        w3m = _pad2d(params["w3"][:, :, 0, 0].T.astype(jnp.bfloat16), cin, c_pad)
        b3 = _pad2d(params["b3"].astype(jnp.float32)[None, :], 1, c_pad)
        out = _bn_conv1x1_add_relu(y2_raw, scale2, shift2, xs, w3m, b3,
                                   rows, n, vmem_limit)
    else:
        assert cin == cout and strides == 1
        skip = jnp.pad(x_bf, ((0, 0), (0, 0), (0, 0), (0, c_pad - cin)))
        out = _bn_add_relu(y2_raw, scale2, shift2, skip.reshape(m, c_pad),
                           rows, n, vmem_limit)

    out = out[:, :cout].reshape(n, ho, wo, cout)
    return jnp.transpose(out, (0, 3, 1, 2))  # NHWC -> NCHW


# ---------------------------------------------------------------------------
# Pure-JAX reference (mirrors the kernel's numerics: bf16 conv operands,
# f32 accumulation / BN math, bf16 y1 intermediate).
# ---------------------------------------------------------------------------
def _ref_conv(x_nhwc, w_oihw, b, stride, pad):
    w_hwio = jnp.transpose(w_oihw, (2, 3, 1, 0)).astype(jnp.bfloat16)
    y = jax.lax.conv_general_dilated(
        x_nhwc.astype(jnp.bfloat16), w_hwio, (stride, stride),
        ((pad, pad), (pad, pad)),
        dimension_numbers=("NHWC", "HWIO", "NHWC"),
        preferred_element_type=jnp.float32)
    if b is not None:
        y = y + b.astype(jnp.float32)
    return y


def _ref_bn_train(y, g, b):
    mean = jnp.mean(y, axis=(0, 1, 2), keepdims=True)
    var = jnp.mean(jnp.square(y - mean), axis=(0, 1, 2), keepdims=True)
    return (y - mean) * jax.lax.rsqrt(var + EPS) * g + b


def residual_reference(params, x_nchw, *, strides=1, use_1x1conv=False):
    x = jnp.transpose(x_nchw, (0, 2, 3, 1)).astype(jnp.float32)
    y = jax.nn.relu(_ref_bn_train(_ref_conv(x, params["w1"], params["b1"], strides, 1),
                                  params["g1"], params["be1"]))
    y = y.astype(jnp.bfloat16).astype(jnp.float32)   # kernel feeds conv2 in bf16
    y = _ref_bn_train(_ref_conv(y, params["w2"], params["b2"], 1, 1),
                      params["g2"], params["be2"])
    if use_1x1conv:
        skip = _ref_conv(x, params["w3"], params["b3"], strides, 0)
    else:
        skip = x
    out = jax.nn.relu(y + skip)
    return jnp.transpose(out, (0, 3, 1, 2))


# ---------------------------------------------------------------------------
if __name__ == "__main__":
    key = jax.random.PRNGKey(0)
    kx, kp1, kp2 = jax.random.split(key, 3)

    # Case 1: projection shortcut (use_1x1conv=True, strides=2)
    #   conv1 -> im2col fallback GEMM, conv2 -> fused halo kernel.
    x = jax.random.normal(kx, (2, 4, 16, 16), jnp.float32)   # NCHW
    params1 = init_residual_params(kp1, input_channels=4, num_channels=8,
                                   use_1x1conv=True)
    out1 = residual_forward(params1, x, strides=2, use_1x1conv=True)
    jax.block_until_ready(out1)
    ref1 = residual_reference(params1, x, strides=2, use_1x1conv=True)
    assert out1.shape == (2, 8, 8, 8)
    assert jnp.allclose(out1, ref1, rtol=2e-2, atol=2e-2), "mismatch (1x1conv case)"

    # Case 2: identity shortcut, stride 1 (both convs use the halo kernel).
    x2 = jax.random.normal(kx, (2, 8, 16, 16), jnp.float32)
    params2 = init_residual_params(kp2, input_channels=8, num_channels=8,
                                   use_1x1conv=False)
    out2 = residual_forward(params2, x2, strides=1, use_1x1conv=False)
    jax.block_until_ready(out2)
    ref2 = residual_reference(params2, x2, strides=1, use_1x1conv=False)
    assert out2.shape == (2, 8, 16, 16)
    assert jnp.allclose(out2, ref2, rtol=2e-2, atol=2e-2), "mismatch (identity case)"

    print("KERNEL_OK")
</pallas_src>

<mosaic_0001>
module attributes {stable_mosaic.version = 11 : i64} {
  func.func @_gemm_stats_kernel(%arg0: i32, %arg1: memref<128x128xbf16, #tpu.memory_space<vmem>>, %arg2: memref<128x128xbf16, #tpu.memory_space<vmem>>, %arg3: memref<128x128xbf16, #tpu.memory_space<vmem>>, %arg4: memref<1x1x128xf32, #tpu.memory_space<vmem>>, %arg5: memref<1x1x128xf32, #tpu.memory_space<vmem>>) attributes {dimension_semantics = [#tpu.dimension_semantics<parallel>], iteration_bounds = array<i64: 1>, scalar_prefetch = 0 : i64, scratch_operands = 0 : i64, tpu.core_type = #tpu.core_type<tc>, window_params = [{transform_indices = @transform_0, window_bounds = array<i64: 128, 128>}, {pipeline_mode = #tpu.pipeline_mode<synchronous>, transform_indices = @transform_1, window_bounds = array<i64: 128, 128>}, {transform_indices = @transform_2, window_bounds = array<i64: 128, 128>}, {transform_indices = @transform_3, window_bounds = array<i64: 1, 1, 128>}, {transform_indices = @transform_4, window_bounds = array<i64: 1, 1, 128>}]} {
    %c0 = arith.constant 0 : index
    %c0_0 = arith.constant 0 : index
    %0 = vector.load %arg1[%c0, %c0_0] : memref<128x128xbf16, #tpu.memory_space<vmem>>, vector<128x128xbf16>
    %c0_1 = arith.constant 0 : index
    %c0_2 = arith.constant 0 : index
    %1 = vector.load %arg2[%c0_1, %c0_2] : memref<128x128xbf16, #tpu.memory_space<vmem>>, vector<128x128xbf16>
    %cst = arith.constant dense<0.000000e+00> : vector<128x128xf32>
    %2 = tpu.matmul %0, %1, %cst {dimension_numbers = #tpu.dot_dimension_numbers<[1], [0], [0], [1], [0, 0, 1, 1], [], []>} : vector<128x128xbf16>, vector<128x128xbf16>, vector<128x128xf32> -> vector<128x128xf32>
    %3 = arith.truncf %2 : vector<128x128xf32> to vector<128x128xbf16>
    %c0_3 = arith.constant 0 : index
    %c0_4 = arith.constant 0 : index
    %4 = vector.load %arg3[%c0_3, %c0_4] : memref<128x128xbf16, #tpu.memory_space<vmem>>, vector<128x128xbf16>
    tpu.vector_store %arg3[%c0_3, %c0_4], %3 {strides = array<i32>} : memref<128x128xbf16, #tpu.memory_space<vmem>>, vector<128x128xbf16>,
    %cst_5 = arith.constant dense<0.000000e+00> : vector<128xf32>
    %5 = vector.multi_reduction <add>, %2, %cst_5 [0] : vector<128x128xf32> to vector<128xf32>
    %6 = vector.shape_cast %5 : vector<128xf32> to vector<1x128xf32>
    %7 = arith.mulf %2, %2 : vector<128x128xf32>
    %cst_6 = arith.constant dense<0.000000e+00> : vector<128xf32>
    %8 = vector.multi_reduction <add>, %7, %cst_6 [0] : vector<128x128xf32> to vector<128xf32>
    %9 = vector.shape_cast %8 : vector<128xf32> to vector<1x128xf32>
    %10 = vector.shape_cast %6 : vector<1x128xf32> to vector<1x1x128xf32>
    %c0_7 = arith.constant 0 : index
    %c0_8 = arith.constant 0 : index
    %c0_9 = arith.constant 0 : index
    %11 = vector.load %arg4[%c0_7, %c0_8, %c0_9] : memref<1x1x128xf32, #tpu.memory_space<vmem>>, vector<1x1x128xf32>
    tpu.vector_store %arg4[%c0_7, %c0_8, %c0_9], %10 {strides = array<i32>} : memref<1x1x128xf32, #tpu.memory_space<vmem>>, vector<1x1x128xf32>,
    %12 = vector.shape_cast %9 : vector<1x128xf32> to vector<1x1x128xf32>
    %c0_10 = arith.constant 0 : index
    %c0_11 = arith.constant 0 : index
    %c0_12 = arith.constant 0 : index
    %13 = vector.load %arg5[%c0_10, %c0_11, %c0_12] : memref<1x1x128xf32, #tpu.memory_space<vmem>>, vector<1x1x128xf32>
    tpu.vector_store %arg5[%c0_10, %c0_11, %c0_12], %12 {strides = array<i32>} : memref<1x1x128xf32, #tpu.memory_space<vmem>>, vector<1x1x128xf32>,
    return
  }
  func.func @transform_0(%arg0: i32) -> (i32, i32) {
    %c0_i32 = arith.constant 0 : i32
    %c0_i32_0 = arith.constant 0 : i32
    return %arg0, %c0_i32 : i32, i32
  }
  func.func @transform_1(%arg0: i32) -> (i32, i32) {
    %c0_i32 = arith.constant 0 : i32
    %c0_i32_0 = arith.constant 0 : i32
    %c0_i32_1 = arith.constant 0 : i32
    return %c0_i32, %c0_i32_0 : i32, i32
  }
  func.func @transform_2(%arg0: i32) -> (i32, i32) {
    %c0_i32 = arith.constant 0 : i32
    %c0_i32_0 = arith.constant 0 : i32
    return %arg0, %c0_i32 : i32, i32
  }
  func.func @transform_3(%arg0: i32) -> (i32, i32, i32) {
    %c0_i32 = arith.constant 0 : i32
    %c0_i32_0 = arith.constant 0 : i32
    %c0_i32_1 = arith.constant 0 : i32
    return %arg0, %c0_i32, %c0_i32_0 : i32, i32, i32
  }
  func.func @transform_4(%arg0: i32) -> (i32, i32, i32) {
    %c0_i32 = arith.constant 0 : i32
    %c0_i32_0 = arith.constant 0 : i32
    %c0_i32_1 = arith.constant 0 : i32
    return %arg0, %c0_i32, %c0_i32_0 : i32, i32, i32
  }
}

</mosaic_0001>

<llo_original>
// kernel: tpu_custom_call.1
$region0: #{tpu_custom_call.1}
  #allocation0 [shape = 'u32[]', space=smem, size = 0x4, offset = 0x4, fixed_abs, tag = 'smem constant byte address 0x4 - core index']
  #allocation1 [shape = 'u32[144,128]{1,0:T(1,128)}', space=vmem, size = 0x12000, scoped, tag = 'internal scratch']
  %s0 = inlined_call_operand.hbm [shape: bf16[128,128], index: 0, kind: input, shape index: {}]
  %s1 = inlined_call_operand.hbm [shape: bf16[128,128], index: 1, kind: input, shape index: {}]
  %s2 = inlined_call_operand.hbm [shape: bf16[128,128], index: 2, kind: output, shape index: {0}]
  %s3 = inlined_call_operand.hbm [shape: f32[1,1,128], index: 3, kind: output, shape index: {1}]
  %s4 = inlined_call_operand.hbm [shape: f32[1,1,128], index: 4, kind: output, shape index: {2}]
  %5 = xla_tuple %s2, %s3, %s4
  %s6 = sld [smem:[#allocation0]]
  $region42: #{tpu_custom_call.1} parent=0
    _
  %s8 = ssub.s32 1, %s6
  %s9 = scalar_select 0, %s8, %s6
  $region1: #{tpu_custom_call.1} parent=0
    #allocation2 [shape = 'u8[32768]{0}', space=vmem, size = 0x8000, scoped, tag = 'input window, operand 0, single buffered']
    #allocation3 [shape = 's32[1]{0}', space=sflag, size = 0x4, scoped, tag = 'scoped memory for tpu_custom_call.1']
    #allocation4 [shape = 's32[1]{0}', space=sflag, size = 0x4, scoped, tag = 'scoped memory for tpu_custom_call.1']
    #allocation5 [shape = 'u8[32768]{0}', space=vmem, size = 0x8000, scoped, tag = 'input window, operand 1, single buffered']
    #allocation6 [shape = 's32[1]{0}', space=sflag, size = 0x4, scoped, tag = 'scoped memory for tpu_custom_call.1']
    #allocation7 [shape = 'u8[32768]{0}', space=vmem, size = 0x8000, scoped, tag = 'output window, operand 0, single buffered']
    #allocation8 [shape = 'u8[512]{0}', space=vmem, size = 0x400, scoped, tag = 'output window, operand 1, single buffered']
    #allocation9 [shape = 's32[1]{0}', space=sflag, size = 0x4, scoped, tag = 'scoped memory for tpu_custom_call.1']
    #allocation10 [shape = 'u8[512]{0}', space=vmem, size = 0x400, scoped, tag = 'output window, operand 2, single buffered']
    %10 = vsyncpa [#allocation3], 0
    %11 = vsyncpa [#allocation6], 0
    %12 = vsyncpa [#allocation4], 0
    %13 = vsyncpa [#allocation9], 0
    // Predicated region
    $region2: #{tpu_custom_call.1} parent=1 // pred_check
      _
    $region3: #{tpu_custom_call.1} parent=1 // pred_check_branch
      %15 = sbr.rel (0) target = $region5
    $region4: #{tpu_custom_call.1} parent=1 // pred_region
      %s17 = ssub.s32 1024, 1024
      %18 = vsyncadd [#allocation3], %s17
      %s19 = sshll.u32 [#allocation2], 4
      %s20 = int_to_ptr.vmem [resolvable:$true] %s19
      %25 = dma.hbm_to_vmem [thread:$0]  %s0, 1024, %s20, [#allocation3], 64, 64, 4
    $region5: #{tpu_custom_call.1} parent=1 // pred_fallthru
      _
    // Predicated region
    $region6: #{tpu_custom_call.1} parent=1 // pred_check
      _
    $region7: #{tpu_custom_call.1} parent=1 // pred_check_branch
      %27 = sbr.rel (0) target = $region9
    $region8: #{tpu_custom_call.1} parent=1 // pred_region
      %s29 = ssub.s32 1024, 1024
      %30 = vsyncadd [#allocation6], %s29
      %s31 = sshll.u32 [#allocation5], 4
      %s32 = int_to_ptr.vmem [resolvable:$true] %s31
      %37 = dma.hbm_to_vmem [thread:$0]  %s1, 1024, %s32, [#allocation6], 64, 64, 4
    $region9: #{tpu_custom_call.1} parent=1 // pred_fallthru
      _
    // Predicated region
    $region10: #{tpu_custom_call.1} parent=1 // pred_check
      _
    $region11: #{tpu_custom_call.1} parent=1 // pred_check_branch
      %39 = sbr.rel (0) target = $region13
    $region12: #{tpu_custom_call.1} parent=1 // pred_region
      %40 = dma.done [#allocation3], 1024
    $region13: #{tpu_custom_call.1} parent=1 // pred_fallthru
      _
    // Predicated region
    $region14: #{tpu_custom_call.1} parent=1 // pred_check
      _
    $region15: #{tpu_custom_call.1} parent=1 // pred_check_branch
      %42 = sbr.rel (0) target = $region17
    $region16: #{tpu_custom_call.1} parent=1 // pred_region
      %43 = dma.done [#allocation6], 1024
    $region17: #{tpu_custom_call.1} parent=1 // pred_fallthru
      _
    %v45 = vld [vmem:[#allocation2] sm:$0xf]
    %v46 = vld [vmem:[#allocation2 + $0x4] sm:$0xf]
    %v47 = vld [vmem:[#allocation2 + $0x8] sm:$0xf]
    %v48 = vld [vmem:[#allocation2 + $0xc] sm:$0xf]
    %v49 = vld [vmem:[#allocation2 + $0x10] sm:$0xf]
    %v50 = vld [vmem:[#allocation2 + $0x14] sm:$0xf]
    %v51 = vld [vmem:[#allocation2 + $0x18] sm:$0xf]
    %v52 = vld [vmem:[#allocation2 + $0x1c] sm:$0xf]
    %v53 = vld [vmem:[#allocation2 + $0x20] sm:$0xf]
    %v54 = vld [vmem:[#allocation2 + $0x24] sm:$0xf]
    %v55 = vld [vmem:[#allocation2 + $0x28] sm:$0xf]
    %v56 = vld [vmem:[#allocation2 + $0x2c] sm:$0xf]
    %v57 = vld [vmem:[#allocation2 + $0x30] sm:$0xf]
    %v58 = vld [vmem:[#allocation2 + $0x34] sm:$0xf]
    %v59 = vld [vmem:[#allocation2 + $0x38] sm:$0xf]
    %v60 = vld [vmem:[#allocation2 + $0x3c] sm:$0xf]
    %v61 = vld [vmem:[#allocation5] sm:$0xf]
    %v62 = vld [vmem:[#allocation5 + $0x4] sm:$0xf]
    %v63 = vld [vmem:[#allocation5 + $0x8] sm:$0xf]
    %v64 = vld [vmem:[#allocation5 + $0xc] sm:$0xf]
    %v65 = vld [vmem:[#allocation5 + $0x10] sm:$0xf]
    %v66 = vld [vmem:[#allocation5 + $0x14] sm:$0xf]
    %v67 = vld [vmem:[#allocation5 + $0x18] sm:$0xf]
    %v68 = vld [vmem:[#allocation5 + $0x1c] sm:$0xf]
    %v69 = vld [vmem:[#allocation5 + $0x20] sm:$0xf]
    %v70 = vld [vmem:[#allocation5 + $0x24] sm:$0xf]
    %v71 = vld [vmem:[#allocation5 + $0x28] sm:$0xf]
    %v72 = vld [vmem:[#allocation5 + $0x2c] sm:$0xf]
    %v73 = vld [vmem:[#allocation5 + $0x30] sm:$0xf]
    %v74 = vld [vmem:[#allocation5 + $0x34] sm:$0xf]
    %v75 = vld [vmem:[#allocation5 + $0x38] sm:$0xf]
    %v76 = vld [vmem:[#allocation5 + $0x3c] sm:$0xf]
    %v93 = vunpack.c.l.b16 %v45
    %v94 = vunpack.c.l.b16 %v46
    %v95 = vunpack.c.l.b16 %v47
    %v96 = vunpack.c.l.b16 %v48
    %v97 = vunpack.c.l.b16 %v49
    %v98 = vunpack.c.l.b16 %v50
    %v99 = vunpack.c.l.b16 %v51
    %v100 = vunpack.c.l.b16 %v52
    %v101 = vunpack.c.l.b16 %v53
    %v102 = vunpack.c.l.b16 %v54
    %v103 = vunpack.c.l.b16 %v55
    %v104 = vunpack.c.l.b16 %v56
    %v105 = vunpack.c.l.b16 %v57
    %v106 = vunpack.c.l.b16 %v58
    %v107 = vunpack.c.l.b16 %v59
    %v108 = vunpack.c.l.b16 %v60
    %v109 = vpack.c.b16 %v94, %v93
    %v110 = vpack.c.b16 %v96, %v95
    %v111 = vpack.c.b16 %v98, %v97
    %v112 = vpack.c.b16 %v100, %v99
    %v113 = vpack.c.b16 %v102, %v101
    %v114 = vpack.c.b16 %v104, %v103
    %v115 = vpack.c.b16 %v106, %v105
    %v116 = vpack.c.b16 %v108, %v107
    %v141 = vunpack.c.l.b16 %v61
    %v142 = vunpack.c.l.b16 %v62
    %v143 = vunpack.c.l.b16 %v63
    %v144 = vunpack.c.l.b16 %v64
    %v145 = vunpack.c.l.b16 %v65
    %v146 = vunpack.c.l.b16 %v66
    %v147 = vunpack.c.l.b16 %v67
    %v148 = vunpack.c.l.b16 %v68
    %v149 = vunpack.c.l.b16 %v69
    %v150 = vunpack.c.l.b16 %v70
    %v151 = vunpack.c.l.b16 %v71
    %v152 = vunpack.c.l.b16 %v72
    %v153 = vunpack.c.l.b16 %v73
    %v154 = vunpack.c.l.b16 %v74
    %v155 = vunpack.c.l.b16 %v75
    %v156 = vunpack.c.l.b16 %v76
    %v157 = vpack.c.b16 %v142, %v141
    %v158 = vpack.c.b16 %v144, %v143
    %v159 = vpack.c.b16 %v146, %v145
    %v160 = vpack.c.b16 %v148, %v147
    %v161 = vpack.c.b16 %v150, %v149
    %v162 = vpack.c.b16 %v152, %v151
    %v163 = vpack.c.b16 %v154, %v153
    %v164 = vpack.c.b16 %v156, %v155
    %173 = vmatprep.subr.bf16.mxu0 0
    %174 = vmatpush1.bf16.msra.mxu0 %v157
    %175 = vmatprep.subr.bf16.mxu0 0
    %176 = vmatpush1.bf16.msra.mxu0 %v158
    %177 = vmatprep.subr.bf16.mxu0 0
    %178 = vmatpush1.bf16.msra.mxu0 %v159
    %179 = vmatprep.subr.bf16.mxu0 0
    %180 = vmatpush1.bf16.msra.mxu0 %v160
    %181 = vmatprep.subr.bf16.mxu0 0
    %182 = vmatpush1.bf16.msra.mxu0 %v161
    %183 = vmatprep.subr.bf16.mxu0 0
    %184 = vmatpush1.bf16.msra.mxu0 %v162
    %185 = vmatprep.subr.bf16.mxu0 0
    %186 = vmatpush1.bf16.msra.mxu0 %v163
    %187 = vmatprep.subr.bf16.mxu0 0
    %188 = vmatpush1.bf16.msra.mxu0 %v164
    %189 = vmatprep.subr.bf16.mxu0 0
    %190 = vmatpush1.bf16.msra.mxu0 0
    %191 = vmatprep.subr.bf16.mxu0 0
    %192 = vmatpush1.bf16.msra.mxu0 0
    %193 = vmatprep.subr.bf16.mxu0 0
    %194 = vmatpush1.bf16.msra.mxu0 0
    %195 = vmatprep.subr.bf16.mxu0 0
    %196 = vmatpush1.bf16.msra.mxu0 0
    %197 = vmatprep.subr.bf16.mxu0 0
    %198 = vmatpush1.bf16.msra.mxu0 0
    %199 = vmatprep.subr.bf16.mxu0 0
    %200 = vmatpush1.bf16.msra.mxu0 0
    %201 = vmatprep.subr.bf16.mxu0 0
    %202 = vmatpush1.bf16.msra.mxu0 0
    %203 = vmatprep.subr.bf16.mxu0 0
    %204 = vmatpush1.bf16.msra.mxu0 0
    %205 = vmatprep.mubr.bf16.mxu0 0
    %206 = vmatmul.mubr.bf16.gmra.mrb[0].mxu0 %v109
    %v207 = vpop.f32.mrb[0].mxu0
    %v208 = vadd.f32 0.0, %v207
    %v209 = vpop.f32.mrb[0].mxu0
    %v210 = vpop.f32.mrb[0].mxu0
    %v211 = vadd.f32 0.0, %v210
    %v212 = vpop.f32.mrb[0].mxu0
    %213 = vmatprep.mubr.bf16.mxu0 0
    %214 = vmatmul.mubr.bf16.gmra.mrb[0].mxu0 %v110
    %v215 = vpop.f32.mrb[0].mxu0
    %v216 = vadd.f32 0.0, %v215
    %v217 = vpop.f32.mrb[0].mxu0
    %v218 = vpop.f32.mrb[0].mxu0
    %v219 = vadd.f32 0.0, %v218
    %v220 = vpop.f32.mrb[0].mxu0
    %221 = vmatprep.mubr.bf16.mxu0 0
    %222 = vmatmul.mubr.bf16.gmra.mrb[0].mxu0 %v111
    %v223 = vpop.f32.mrb[0].mxu0
    %v224 = vadd.f32 0.0, %v223
    %v225 = vpop.f32.mrb[0].mxu0
    %v226 = vpop.f32.mrb[0].mxu0
    %v227 = vadd.f32 0.0, %v226
    %v228 = vpop.f32.mrb[0].mxu0
    %229 = vmatprep.mubr.bf16.mxu0 0
    %230 = vmatmul.mubr.bf16.gmra.mrb[0].mxu0 %v112
    %v231 = vpop.f32.mrb[0].mxu0
    %v232 = vadd.f32 0.0, %v231
    %v233 = vpop.f32.mrb[0].mxu0
    %v234 = vpop.f32.mrb[0].mxu0
    %v235 = vadd.f32 0.0, %v234
    %v236 = vpop.f32.mrb[0].mxu0
    %237 = vmatprep.mubr.bf16.mxu0 0
    %238 = vmatmul.mubr.bf16.gmra.mrb[0].mxu0 %v113
    %v239 = vpop.f32.mrb[0].mxu0
    %v240 = vadd.f32 0.0, %v239
    %v241 = vpop.f32.mrb[0].mxu0
    %v242 = vpop.f32.mrb[0].mxu0
    %v243 = vadd.f32 0.0, %v242
    %v244 = vpop.f32.mrb[0].mxu0
    %245 = vmatprep.mubr.bf16.mxu0 0
    %246 = vmatmul.mubr.bf16.gmra.mrb[0].mxu0 %v114
    %v247 = vpop.f32.mrb[0].mxu0
    %v248 = vadd.f32 0.0, %v247
    %v249 = vpop.f32.mrb[0].mxu0
    %v250 = vpop.f32.mrb[0].mxu0
    %v251 = vadd.f32 0.0, %v250
    %v252 = vpop.f32.mrb[0].mxu0
    %253 = vmatprep.mubr.bf16.mxu0 0
    %254 = vmatmul.mubr.bf16.gmra.mrb[0].mxu0 %v115
    %v255 = vpop.f32.mrb[0].mxu0
    %v256 = vadd.f32 0.0, %v255
    %v257 = vpop.f32.mrb[0].mxu0
    %v258 = vpop.f32.mrb[0].mxu0
    %v259 = vadd.f32 0.0, %v258
    %v260 = vpop.f32.mrb[0].mxu0
    %261 = vmatprep.mubr.bf16.mxu0 0
    %262 = vmatmul.mubr.bf16.gmra.mrb[0].mxu0 %v116
    %v263 = vpop.f32.mrb[0].mxu0
    %v264 = vadd.f32 0.0, %v263
    %v265 = vpop.f32.mrb[0].mxu0
    %v266 = vpop.f32.mrb[0].mxu0
    %v267 = vadd.f32 0.0, %v266
    %v268 = vpop.f32.mrb[0].mxu0
    %269 = vdwg.mxu0
    %v270 = vpack.c.bf16 %v211, %v208
    %v271 = vpack.c.bf16 %v219, %v216
    %v272 = vpack.c.bf16 %v227, %v224
    %v273 = vpack.c.bf16 %v235, %v232
    %v274 = vpack.c.bf16 %v243, %v240
    %v275 = vpack.c.bf16 %v251, %v248
    %v276 = vpack.c.bf16 %v259, %v256
    %v277 = vpack.c.bf16 %v267, %v264
    %v286 = vunpack.c.l.b16 %v270
    %v287 = vunpack.c.h.b16 %v270
    %v288 = vunpack.c.l.b16 %v271
    %v289 = vunpack.c.h.b16 %v271
    %v290 = vunpack.c.l.b16 %v272
    %v291 = vunpack.c.h.b16 %v272
    %v292 = vunpack.c.l.b16 %v273
    %v293 = vunpack.c.h.b16 %v273
    %v294 = vunpack.c.l.b16 %v274
    %v295 = vunpack.c.h.b16 %v274
    %v296 = vunpack.c.l.b16 %v275
    %v297 = vunpack.c.h.b16 %v275
    %v298 = vunpack.c.l.b16 %v276
    %v299 = vunpack.c.h.b16 %v276
    %v300 = vunpack.c.l.b16 %v277
    %v301 = vunpack.c.h.b16 %v277
    %v302 = vpack.c.b16 %v286, %v286
    %v303 = vpack.c.b16 %v287, %v287
    %v304 = vpack.c.b16 %v288, %v288
    %v305 = vpack.c.b16 %v289, %v289
    %v306 = vpack.c.b16 %v290, %v290
    %v307 = vpack.c.b16 %v291, %v291
    %v308 = vpack.c.b16 %v292, %v292
    %v309 = vpack.c.b16 %v293, %v293
    %v310 = vpack.c.b16 %v294, %v294
    %v311 = vpack.c.b16 %v295, %v295
    %v312 = vpack.c.b16 %v296, %v296
    %v313 = vpack.c.b16 %v297, %v297
    %v314 = vpack.c.b16 %v298, %v298
    %v315 = vpack.c.b16 %v299, %v299
    %v316 = vpack.c.b16 %v300, %v300
    %v317 = vpack.c.b16 %v301, %v301
    %334 = vst [vmem:[#allocation7] sm:$0xf] %v302
    %335 = vst [vmem:[#allocation7 + $0x4] sm:$0xf] %v303
    %336 = vst [vmem:[#allocation7 + $0x8] sm:$0xf] %v304
    %337 = vst [vmem:[#allocation7 + $0xc] sm:$0xf] %v305
    %338 = vst [vmem:[#allocation7 + $0x10] sm:$0xf] %v306
    %339 = vst [vmem:[#allocation7 + $0x14] sm:$0xf] %v307
    %340 = vst [vmem:[#allocation7 + $0x18] sm:$0xf] %v308
    %341 = vst [vmem:[#allocation7 + $0x1c] sm:$0xf] %v309
    %342 = vst [vmem:[#allocation7 + $0x20] sm:$0xf] %v310
    %343 = vst [vmem:[#allocation7 + $0x24] sm:$0xf] %v311
    %344 = vst [vmem:[#allocation7 + $0x28] sm:$0xf] %v312
    %345 = vst [vmem:[#allocation7 + $0x2c] sm:$0xf] %v313
    %346 = vst [vmem:[#allocation7 + $0x30] sm:$0xf] %v314
    %347 = vst [vmem:[#allocation7 + $0x34] sm:$0xf] %v315
    %348 = vst [vmem:[#allocation7 + $0x38] sm:$0xf] %v316
    %349 = vst [vmem:[#allocation7 + $0x3c] sm:$0xf] %v317
    %v350 = vadd.f32 %v208, %v211
    %v351 = vadd.f32 %v350, %v216
    %v352 = vadd.f32 %v351, %v219
    %v353 = vadd.f32 %v352, %v224
    %v354 = vadd.f32 %v353, %v227
    %v355 = vadd.f32 %v354, %v232
    %v356 = vadd.f32 %v355, %v235
    %v357 = vadd.f32 %v356, %v240
    %v358 = vadd.f32 %v357, %v243
    %v359 = vadd.f32 %v358, %v248
    %v360 = vadd.f32 %v359, %v251
    %v361 = vadd.f32 %v360, %v256
    %v362 = vadd.f32 %v361, %v259
    %v363 = vadd.f32 %v362, %v264
    %v364 = vadd.f32 %v363, %v267
    %v365 = vrot.slane %v364, 4
    %v366 = vadd.f32 %v364, %v365
    %v367 = vrot.slane %v366, 2
    %v368 = vadd.f32 %v366, %v367
    %v369 = vrot.slane %v368, 1
    %v370 = vadd.f32 %v368, %v369
    %v371 = vmul.f32 %v208, %v208
    %v372 = vmul.f32 %v211, %v211
    %v373 = vmul.f32 %v216, %v216
    %v374 = vmul.f32 %v219, %v219
    %v375 = vmul.f32 %v224, %v224
    %v376 = vmul.f32 %v227, %v227
    %v377 = vmul.f32 %v232, %v232
    %v378 = vmul.f32 %v235, %v235
    %v379 = vmul.f32 %v240, %v240
    %v380 = vmul.f32 %v243, %v243
    %v381 = vmul.f32 %v248, %v248
    %v382 = vmul.f32 %v251, %v251
    %v383 = vmul.f32 %v256, %v256
    %v384 = vmul.f32 %v259, %v259
    %v385 = vmul.f32 %v264, %v264
    %v386 = vmul.f32 %v267, %v267
    %v387 = vadd.f32 %v371, %v372
    %v388 = vadd.f32 %v387, %v373
    %v389 = vadd.f32 %v388, %v374
    %v390 = vadd.f32 %v389, %v375
    %v391 = vadd.f32 %v390, %v376
    %v392 = vadd.f32 %v391, %v377
    %v393 = vadd.f32 %v392, %v378
    %v394 = vadd.f32 %v393, %v379
    %v395 = vadd.f32 %v394, %v380
    %v396 = vadd.f32 %v395, %v381
    %v397 = vadd.f32 %v396, %v382
    %v398 = vadd.f32 %v397, %v383
    %v399 = vadd.f32 %v398, %v384
    %v400 = vadd.f32 %v399, %v385
    %v401 = vadd.f32 %v400, %v386
    %v402 = vrot.slane %v401, 4
    %v403 = vadd.f32 %v401, %v402
    %v404 = vrot.slane %v403, 2
    %v405 = vadd.f32 %v403, %v404
    %v406 = vrot.slane %v405, 1
    %v407 = vadd.f32 %v405, %v406
    %408 = vst [vmem:[#allocation8] sm:$0x1] %v370
    %409 = vst [vmem:[#allocation10] sm:$0x1] %v407
    // Predicated region
    $region18: #{tpu_custom_call.1} parent=1 // pred_check
      _
    $region19: #{tpu_custom_call.1} parent=1 // pred_check_branch
      %411 = sbr.rel (0) target = $region21
    $region20: #{tpu_custom_call.1} parent=1 // pred_region
      %s413 = ssub.s32 1024, 1024
      %414 = vsyncadd [#allocation4], %s413
      %s415 = sshll.u32 [#allocation7], 4
      %s416 = int_to_ptr.vmem [resolvable:$true] %s415
      %421 = dma.vmem_to_hbm [thread:$0]  %s416, 1024, %s2, [#allocation4], 64, 64, 4
    $region21: #{tpu_custom_call.1} parent=1 // pred_fallthru
      _
    // Predicated region
    $region22: #{tpu_custom_call.1} parent=1 // pred_check
      _
    $region23: #{tpu_custom_call.1} parent=1 // pred_check_branch
      %423 = sbr.rel (0) target = $region25
    $region24: #{tpu_custom_call.1} parent=1 // pred_region
      %s425 = ssub.s32 16, 16
      %426 = vsyncadd [#allocation9], %s425
      %s428 = sshll.u32 [#allocation8], 4
      %s429 = int_to_ptr.vmem [resolvable:$true] %s428
      %431 = dma.vmem_to_hbm [thread:$0]  %s429, 16, %s3, [#allocation9]
    $region25: #{tpu_custom_call.1} parent=1 // pred_fallthru
      _
    // Predicated region
    $region26: #{tpu_custom_call.1} parent=1 // pred_check
      _
    $region27: #{tpu_custom_call.1} parent=1 // pred_check_branch
      %433 = sbr.rel (0) target = $region29
    $region28: #{tpu_custom_call.1} parent=1 // pred_region
      %s435 = ssub.s32 16, 16
      %436 = vsyncadd [#allocation9], %s435
      %s438 = sshll.u32 [#allocation10], 4
      %s439 = int_to_ptr.vmem [resolvable:$true] %s438
      %441 = dma.vmem_to_hbm [thread:$0]  %s439, 16, %s4, [#allocation9]
    $region29: #{tpu_custom_call.1} parent=1 // pred_fallthru
      _
    // Predicated region
    $region30: #{tpu_custom_call.1} parent=1 // pred_check
      _
    $region31: #{tpu_custom_call.1} parent=1 // pred_check_branch
      %443 = sbr.rel (0) target = $region33
    $region32: #{tpu_custom_call.1} parent=1 // pred_region
      %444 = dma.done [#allocation4], 1024
    $region33: #{tpu_custom_call.1} parent=1 // pred_fallthru
      _
    // Predicated region
    $region34: #{tpu_custom_call.1} parent=1 // pred_check
      _
    $region35: #{tpu_custom_call.1} parent=1 // pred_check_branch
      %446 = sbr.rel (0) target = $region37
    $region36: #{tpu_custom_call.1} parent=1 // pred_region
      %447 = dma.done [#allocation9], 16
    $region37: #{tpu_custom_call.1} parent=1 // pred_fallthru
      _
    // Predicated region
    $region38: #{tpu_custom_call.1} parent=1 // pred_check
      _
    $region39: #{tpu_custom_call.1} parent=1 // pred_check_branch
      %449 = sbr.rel (0) target = $region41
    $region40: #{tpu_custom_call.1} parent=1 // pred_region
      %450 = dma.done [#allocation9], 16
    $region41: #{tpu_custom_call.1} parent=1 // pred_fallthru
      _
    %451 = vsyncpa [#allocation3], 1
    %452 = vsyncpa [#allocation6], 1
    %453 = vsyncpa [#allocation4], 1
    %454 = vsyncpa [#allocation9], 1

</llo_original>
